<compile_context>
chip_gen: v7x
topology: tpu7x:2x2x1
jax: 0.10.0
libtpu: 0.0.40
codegen_flags: <defaults>
</compile_context>

<pallas_src>
import functools

import jax
import jax.numpy as jnp
from jax import lax
from jax.experimental import pallas as pl
from jax.experimental.pallas import tpu as pltpu


def _round_up(x, m):
    return ((x + m - 1) // m) * m


def _focal_loss_kernel(x_ref, *rest, alpha, gamma, size_average, n_rows,
                       share_adv):
    if share_adv:
        t_ref, out_ref = rest
        xadv_ref = None
    else:
        xadv_ref, t_ref, out_ref = rest

    pid = pl.program_id(0)

    @pl.when(pid == 0)
    def _init():
        out_ref[...] = jnp.zeros_like(out_ref)

    x = x_ref[...].astype(jnp.float32)           # (TILE_N, C) clean logits
    t = t_ref[...]                               # (TILE_N, 1) int32 targets
    tn, c = x.shape

    col = lax.broadcasted_iota(jnp.int32, (tn, c), 1)
    onehot = col == t                            # (TILE_N, C) gather mask

    def log_softmax_gather(logits):
        # log(softmax(logits)[i, t[i]]) computed stably, per row.
        m = jnp.max(logits, axis=1, keepdims=True)
        s = logits - m
        lse = jnp.log(jnp.sum(jnp.exp(s), axis=1, keepdims=True))
        s_t = jnp.sum(jnp.where(onehot, s, 0.0), axis=1, keepdims=True)
        return s_t - lse                          # (TILE_N, 1)

    log_pt = log_softmax_gather(x)                # log(pt), clean branch
    if share_adv:
        log_pt_scale = log_pt                     # inputs_adv is None => same array
    else:
        x_adv = xadv_ref[...].astype(jnp.float32)
        log_pt_scale = log_softmax_gather(x_adv)

    pt_scale = jnp.exp(log_pt_scale)              # (TILE_N, 1)
    w = 1.0 - pt_scale

    # focal weight: alpha * (1 - pt_scale)^gamma, specialized for integer gamma
    g = float(gamma)
    if g == 2.0:
        fw = w * w                                # VPU square, no EUP pow
    elif g == 1.0:
        fw = w
    elif g == int(g) and int(g) >= 0:
        fw = jnp.ones_like(w)
        for _ in range(int(g)):
            fw = fw * w
    else:
        fw = jnp.power(w, g)
    if float(alpha) != 1.0:
        fw = fw * float(alpha)

    batch_loss = -fw * log_pt                     # (TILE_N, 1), >= 0

    # mask rows beyond the true batch size (remainder tile)
    row = pid * tn + lax.broadcasted_iota(jnp.int32, (tn, 1), 0)
    batch_loss = jnp.where(row < n_rows, batch_loss, 0.0)

    out_ref[...] += jnp.sum(batch_loss, axis=0, keepdims=True)

    @pl.when(pid == pl.num_programs(0) - 1)
    def _finalize():
        if size_average:
            out_ref[...] = out_ref[...] * (1.0 / n_rows)


# TODO(synk): ensemble_training / aggregate_ensemble (second_inputs_adv) and
# inputs_adv_is_prob=True branches are not implemented (default FocalLoss()).
def focal_loss(inputs, targets, inputs_adv=None, *, alpha=1.0, gamma=2.0,
               size_average=True, tile_n=None):
    """inputs: (N, C) float logits; targets: (N,) or (N, 1) int class ids."""
    share_adv = inputs_adv is None
    n, c = inputs.shape
    targets = jnp.asarray(targets, jnp.int32).reshape(n, 1)

    # Tile selection: biggest row tile that keeps the double-buffered logits
    # blocks comfortably under the scoped VMEM limit on all generations.
    if tile_n is None:
        bytes_per_row = 4 * c * (1 if share_adv else 2)
        vmem_budget = 8 * 1024 * 1024
        tile_n = max(8, min(1024, vmem_budget // max(1, 2 * bytes_per_row)))
    tile_n = min(int(tile_n), _round_up(n, 8))
    tile_n = _round_up(tile_n, 8)
    grid = (pl.cdiv(n, tile_n),)

    kernel = functools.partial(
        _focal_loss_kernel, alpha=float(alpha), gamma=float(gamma),
        size_average=bool(size_average), n_rows=n, share_adv=share_adv)

    in_specs = [pl.BlockSpec((tile_n, c), lambda i: (i, 0))]
    operands = [inputs]
    if not share_adv:
        in_specs.append(pl.BlockSpec((tile_n, c), lambda i: (i, 0)))
        operands.append(inputs_adv)
    in_specs.append(pl.BlockSpec((tile_n, 1), lambda i: (i, 0)))
    operands.append(targets)

    n_logit_arrays = 1 if share_adv else 2
    cost = pl.CostEstimate(
        flops=int(6 * n * c * n_logit_arrays + 8 * n),
        transcendentals=int(n * c * n_logit_arrays + 2 * n),
        bytes_accessed=int(4 * n * c * n_logit_arrays + 4 * n + 4),
    )

    out = pl.pallas_call(
        kernel,
        out_shape=jax.ShapeDtypeStruct((1, 1), jnp.float32),
        grid=grid,
        in_specs=in_specs,
        out_specs=pl.BlockSpec((1, 1), lambda i: (0, 0)),
        compiler_params=pltpu.CompilerParams(
            dimension_semantics=("arbitrary",)),
        cost_estimate=cost,
    )(*operands)
    return out[0, 0]


def _reference_focal_loss(inputs, targets, inputs_adv, alpha=1.0, gamma=2.0):
    t = targets.reshape(-1, 1)
    logp = jax.nn.log_softmax(inputs.astype(jnp.float32), axis=1)
    log_pt = jnp.take_along_axis(logp, t, axis=1)
    logp_adv = jax.nn.log_softmax(inputs_adv.astype(jnp.float32), axis=1)
    pt_scale = jnp.exp(jnp.take_along_axis(logp_adv, t, axis=1))
    batch_loss = -alpha * (1.0 - pt_scale) ** gamma * log_pt
    return jnp.mean(batch_loss)


if __name__ == "__main__":
    key = jax.random.PRNGKey(0)
    k_x, k_adv, k_t, k_x2, k_t2 = jax.random.split(key, 5)

    # Default path (inputs_adv=None): single logits stream, pt_scale == pt.
    N, C = 32, 16
    x = jax.random.normal(k_x, (N, C), dtype=jnp.float32)
    t = jax.random.randint(k_t, (N,), 0, C, dtype=jnp.int32)
    loss = focal_loss(x, t)
    jax.block_until_ready(loss)
    ref = _reference_focal_loss(x, t, x)
    assert jnp.allclose(loss, ref, rtol=1e-5, atol=1e-6), (loss, ref)

    # Explicit inputs_adv path (two logits streams).
    x_adv = x + 0.1 * jax.random.normal(k_adv, (N, C), dtype=jnp.float32)
    loss_adv = focal_loss(x, t, x_adv)
    jax.block_until_ready(loss_adv)
    ref_adv = _reference_focal_loss(x, t, x_adv)
    assert jnp.allclose(loss_adv, ref_adv, rtol=1e-5, atol=1e-6), (loss_adv, ref_adv)

    # Multi-tile grid with a remainder tile (exercises masking + accumulator).
    N2, C2 = 40, 16
    x2 = jax.random.normal(k_x2, (N2, C2), dtype=jnp.float32)
    t2 = jax.random.randint(k_t2, (N2,), 0, C2, dtype=jnp.int32)
    loss2 = focal_loss(x2, t2, tile_n=16)
    jax.block_until_ready(loss2)
    ref2 = _reference_focal_loss(x2, t2, x2)
    assert jnp.allclose(loss2, ref2, rtol=1e-5, atol=1e-6), (loss2, ref2)

    print("KERNEL_OK")
</pallas_src>

<mosaic_0001>
module attributes {stable_mosaic.version = 11 : i64} {
  func.func @_focal_loss_kernel(%arg0: i32, %arg1: memref<32x16xf32, #tpu.memory_space<vmem>>, %arg2: memref<32x1xi32, #tpu.memory_space<vmem>>, %arg3: memref<1x1xf32, #tpu.memory_space<vmem>>) attributes {dimension_semantics = [#tpu.dimension_semantics<arbitrary>], iteration_bounds = array<i64: 1>, scalar_prefetch = 0 : i64, scratch_operands = 0 : i64, tpu.core_type = #tpu.core_type<tc>, window_params = [{transform_indices = @transform_0, window_bounds = array<i64: 32, 16>}, {transform_indices = @transform_1, window_bounds = array<i64: 32, 1>}, {pipeline_mode = #tpu.pipeline_mode<synchronous>, transform_indices = @transform_2, window_bounds = array<i64: 1, 1>}]} {
    %c0_i32 = arith.constant 0 : i32
    %0 = arith.cmpi eq, %arg0, %c0_i32 : i32
    %1 = arith.extui %0 : i1 to i32
    %c0_i32_0 = arith.constant 0 : i32
    %2 = arith.cmpi ne, %1, %c0_i32_0 : i32
    scf.if %2 {
      %cst_18 = arith.constant 0.000000e+00 : f32
      %44 = vector.broadcast %cst_18 : f32 to vector<1x1xf32>
      %c0_19 = arith.constant 0 : index
      %c0_20 = arith.constant 0 : index
      %45 = vector.load %arg3[%c0_19, %c0_20] : memref<1x1xf32, #tpu.memory_space<vmem>>, vector<1x1xf32>
      tpu.vector_store %arg3[%c0_19, %c0_20], %44 {strides = array<i32>} : memref<1x1xf32, #tpu.memory_space<vmem>>, vector<1x1xf32>,
    } else {
    }
    %c0 = arith.constant 0 : index
    %c0_1 = arith.constant 0 : index
    %3 = vector.load %arg1[%c0, %c0_1] : memref<32x16xf32, #tpu.memory_space<vmem>>, vector<32x16xf32>
    %c0_2 = arith.constant 0 : index
    %c0_3 = arith.constant 0 : index
    %4 = vector.load %arg2[%c0_2, %c0_3] : memref<32x1xi32, #tpu.memory_space<vmem>>, vector<32x1xi32>
    %5 = tpu.iota {dimensions = array<i32: 1>} : vector<32x16xi32>
    %6 = vector.broadcast %4 : vector<32x1xi32> to vector<32x16xi32>
    %7 = arith.cmpi eq, %5, %6 : vector<32x16xi32>
    %cst = arith.constant dense<0xFF800000> : vector<32xf32>
    %8 = vector.multi_reduction <maximumf>, %3, %cst [1] : vector<32x16xf32> to vector<32xf32>
    %9 = vector.shape_cast %8 : vector<32xf32> to vector<32x1xf32>
    %10 = vector.broadcast %9 : vector<32x1xf32> to vector<32x16xf32>
    %11 = arith.subf %3, %10 : vector<32x16xf32>
    %12 = math.exp %11 : vector<32x16xf32>
    %cst_4 = arith.constant dense<0.000000e+00> : vector<32xf32>
    %13 = vector.multi_reduction <add>, %12, %cst_4 [1] : vector<32x16xf32> to vector<32xf32>
    %14 = vector.shape_cast %13 : vector<32xf32> to vector<32x1xf32>
    %15 = math.log %14 : vector<32x1xf32>
    %cst_5 = arith.constant 0.000000e+00 : f32
    %16 = vector.broadcast %cst_5 : f32 to vector<32x16xf32>
    %17 = arith.select %7, %11, %16 : vector<32x16xi1>, vector<32x16xf32>
    %cst_6 = arith.constant dense<0.000000e+00> : vector<32xf32>
    %18 = vector.multi_reduction <add>, %17, %cst_6 [1] : vector<32x16xf32> to vector<32xf32>
    %19 = vector.shape_cast %18 : vector<32xf32> to vector<32x1xf32>
    %20 = arith.subf %19, %15 : vector<32x1xf32>
    %21 = math.exp %20 : vector<32x1xf32>
    %cst_7 = arith.constant 1.000000e+00 : f32
    %22 = vector.broadcast %cst_7 : f32 to vector<32x1xf32>
    %23 = arith.subf %22, %21 : vector<32x1xf32>
    %24 = arith.mulf %23, %23 : vector<32x1xf32>
    %cst_8 = arith.constant 0.000000e+00 : f32
    %25 = vector.broadcast %cst_8 : f32 to vector<32x1xf32>
    %26 = arith.subf %25, %24 : vector<32x1xf32>
    %27 = arith.mulf %26, %20 : vector<32x1xf32>
    %c32_i32 = arith.constant 32 : i32
    %28 = arith.muli %arg0, %c32_i32 : i32
    %29 = tpu.iota {dimensions = array<i32: 0>} : vector<32x1xi32>
    %30 = vector.broadcast %28 : i32 to vector<32x1xi32>
    %31 = arith.addi %30, %29 : vector<32x1xi32>
    %c32_i32_9 = arith.constant 32 : i32
    %32 = vector.broadcast %c32_i32_9 : i32 to vector<32x1xi32>
    %33 = arith.cmpi slt, %31, %32 : vector<32x1xi32>
    %cst_10 = arith.constant 0.000000e+00 : f32
    %34 = vector.broadcast %cst_10 : f32 to vector<32x1xf32>
    %35 = arith.select %33, %27, %34 : vector<32x1xi1>, vector<32x1xf32>
    %c0_11 = arith.constant 0 : index
    %c0_12 = arith.constant 0 : index
    %36 = vector.load %arg3[%c0_11, %c0_12] : memref<1x1xf32, #tpu.memory_space<vmem>>, vector<1x1xf32>
    %cst_13 = arith.constant dense<0.000000e+00> : vector<1xf32>
    %37 = vector.multi_reduction <add>, %35, %cst_13 [0] : vector<32x1xf32> to vector<1xf32>
    %38 = vector.shape_cast %37 : vector<1xf32> to vector<1x1xf32>
    %39 = arith.addf %36, %38 : vector<1x1xf32>
    %c0_14 = arith.constant 0 : index
    %c0_15 = arith.constant 0 : index
    %40 = vector.load %arg3[%c0_14, %c0_15] : memref<1x1xf32, #tpu.memory_space<vmem>>, vector<1x1xf32>
    tpu.vector_store %arg3[%c0_14, %c0_15], %39 {strides = array<i32>} : memref<1x1xf32, #tpu.memory_space<vmem>>, vector<1x1xf32>,
    %c0_i32_16 = arith.constant 0 : i32
    %41 = arith.cmpi eq, %arg0, %c0_i32_16 : i32
    %42 = arith.extui %41 : i1 to i32
    %c0_i32_17 = arith.constant 0 : i32
    %43 = arith.cmpi ne, %42, %c0_i32_17 : i32
    scf.if %43 {
      %c0_18 = arith.constant 0 : index
      %c0_19 = arith.constant 0 : index
      %44 = vector.load %arg3[%c0_18, %c0_19] : memref<1x1xf32, #tpu.memory_space<vmem>>, vector<1x1xf32>
      %cst_20 = arith.constant 3.125000e-02 : f32
      %45 = vector.broadcast %cst_20 : f32 to vector<1x1xf32>
      %46 = arith.mulf %44, %45 : vector<1x1xf32>
      %c0_21 = arith.constant 0 : index
      %c0_22 = arith.constant 0 : index
      %47 = vector.load %arg3[%c0_21, %c0_22] : memref<1x1xf32, #tpu.memory_space<vmem>>, vector<1x1xf32>
      tpu.vector_store %arg3[%c0_21, %c0_22], %46 {strides = array<i32>} : memref<1x1xf32, #tpu.memory_space<vmem>>, vector<1x1xf32>,
    } else {
    }
    return
  }
  func.func @transform_0(%arg0: i32) -> (i32, i32) {
    %c0_i32 = arith.constant 0 : i32
    %c0_i32_0 = arith.constant 0 : i32
    return %arg0, %c0_i32 : i32, i32
  }
  func.func @transform_1(%arg0: i32) -> (i32, i32) {
    %c0_i32 = arith.constant 0 : i32
    %c0_i32_0 = arith.constant 0 : i32
    return %arg0, %c0_i32 : i32, i32
  }
  func.func @transform_2(%arg0: i32) -> (i32, i32) {
    %c0_i32 = arith.constant 0 : i32
    %c0_i32_0 = arith.constant 0 : i32
    %c0_i32_1 = arith.constant 0 : i32
    return %c0_i32, %c0_i32_0 : i32, i32
  }
}

</mosaic_0001>

<llo_original>
// kernel: tpu_custom_call.1
$region0: #{tpu_custom_call.1}
  #allocation0 [shape = 'u32[]', space=smem, size = 0x4, offset = 0x4, fixed_abs, tag = 'smem constant byte address 0x4 - core index']
  #allocation1 [shape = 'u32[144,128]{1,0:T(1,128)}', space=vmem, size = 0x12000, scoped, tag = 'internal scratch']
  %s0 = inlined_call_operand.vmem [shape: f32[32,16], index: 0, kind: input, shape index: {}]
  %s1 = inlined_call_operand.vmem [shape: s32[32,1], index: 1, kind: input, shape index: {}]
  %s2 = inlined_call_operand.hbm [shape: f32[1,1], index: 2, kind: output, shape index: {}]
  %s3 = sld [smem:[#allocation0]]
  $region26: #{tpu_custom_call.1} parent=0
    _
  %s5 = ssub.s32 1, %s3
  %s6 = scalar_select 0, %s5, %s3
  $region1: #{tpu_custom_call.1} parent=0
    #allocation2 [shape = 'u8[512]{0}', space=vmem, size = 0x400, scoped, tag = 'output window, operand 0, single buffered']
    #allocation3 [shape = 's32[1]{0}', space=sflag, size = 0x4, scoped, tag = 'scoped memory for tpu_custom_call.1']
    %7 = vsyncpa [#allocation3], 0
    // Predicated region
    $region2: #{tpu_custom_call.1} parent=1 // pred_check
      _
    $region3: #{tpu_custom_call.1} parent=1 // pred_check_branch
      %9 = sbr.rel (0) target = $region5
    $region4: #{tpu_custom_call.1} parent=1 // pred_region
      _
    $region5: #{tpu_custom_call.1} parent=1 // pred_fallthru
      _
    // Predicated region
    $region6: #{tpu_custom_call.1} parent=1 // pred_check
      _
    $region7: #{tpu_custom_call.1} parent=1 // pred_check_branch
      %11 = sbr.rel (0) target = $region9
    $region8: #{tpu_custom_call.1} parent=1 // pred_region
      _
    $region9: #{tpu_custom_call.1} parent=1 // pred_fallthru
      _
    %p12 = scmp.eq.s32.totalorder 0, 0
    // Predicated region
    $region10: #{tpu_custom_call.1} parent=1 // pred_check
      %p13 = pneg %p12
    $region11: #{tpu_custom_call.1} parent=1 // pred_check_branch
      %15 = sbr.rel (%p13) target = $region13
    $region12: #{tpu_custom_call.1} parent=1 // pred_region
      %vm16 = vcmask 0
      %17 = vst.msk [vmem:[#allocation2] sm:$0x1] %vm16, 0.0
    $region13: #{tpu_custom_call.1} parent=1 // pred_fallthru
      _
    %v18 = vld [vmem:[%s0] sm:$0xff]
    %v19 = vld [vmem:[%s0 + $0x8] sm:$0xff]
    %v20 = vld [vmem:[%s0 + $0x10] sm:$0xff]
    %v21 = vld [vmem:[%s0 + $0x18] sm:$0xff]
    %v22 = vld [vmem:[%s1] sm:$0xff]
    %v23 = vld [vmem:[%s1 + $0x8] sm:$0xff]
    %v24 = vld [vmem:[%s1 + $0x10] sm:$0xff]
    %v25 = vld [vmem:[%s1 + $0x18] sm:$0xff]
    %v26 = vlaneseq
    %v27 = vand.u32 %v26, 127
    %28 = vset.pattern.permute.xlu0 0
    %29 = vperm.xlu0 %28, %v22
    %v30 = vpop.permute.xlu0 %29
    %31 = vset.pattern.permute.xlu0 0
    %32 = vperm.xlu0 %31, %v23
    %v33 = vpop.permute.xlu0 %32
    %34 = vset.pattern.permute.xlu0 0
    %35 = vperm.xlu0 %34, %v24
    %v36 = vpop.permute.xlu0 %35
    %37 = vset.pattern.permute.xlu0 0
    %38 = vperm.xlu0 %37, %v25
    %v39 = vpop.permute.xlu0 %38
    %vm40 = vcmp.eq.s32.totalorder %v27, %v30
    %vm41 = vcmp.eq.s32.totalorder %v27, %v33
    %vm42 = vcmp.eq.s32.totalorder %v27, %v36
    %vm43 = vcmp.eq.s32.totalorder %v27, %v39
    %vm44 = vcmask 130048
    %v45 = vsel %vm44, %v18, -inf
    %46 = vmax.xlane.f32.xlu0 %v45
    %v47 = vpop.xlane.xlu0 %46
    %v48 = vsel %vm44, %v19, -inf
    %49 = vmax.xlane.f32.xlu0 %v48
    %v50 = vpop.xlane.xlu0 %49
    %v51 = vsel %vm44, %v20, -inf
    %52 = vmax.xlane.f32.xlu0 %v51
    %v53 = vpop.xlane.xlu0 %52
    %v54 = vsel %vm44, %v21, -inf
    %55 = vmax.xlane.f32.xlu0 %v54
    %v56 = vpop.xlane.xlu0 %55
    %v57 = vsub.f32 %v18, %v47
    %v58 = vsub.f32 %v19, %v50
    %v59 = vsub.f32 %v20, %v53
    %v60 = vsub.f32 %v21, %v56
    %v61 = vmul.f32 %v57, 1.442695
    %v62 = vpow.pop %v61
    %v63 = vmul.f32 %v58, 1.442695
    %v64 = vpow.pop %v63
    %v65 = vmul.f32 %v59, 1.442695
    %v66 = vpow.pop %v65
    %v67 = vmul.f32 %v60, 1.442695
    %v68 = vpow.pop %v67
    %v69 = vsel %vm44, %v62, 0.0
    %70 = vadd.xlane.f32.xlu0 %v69
    %v71 = vpop.xlane.xlu0 %70
    %v72 = vsel %vm44, %v64, 0.0
    %73 = vadd.xlane.f32.xlu0 %v72
    %v74 = vpop.xlane.xlu0 %73
    %v75 = vsel %vm44, %v66, 0.0
    %76 = vadd.xlane.f32.xlu0 %v75
    %v77 = vpop.xlane.xlu0 %76
    %v78 = vsel %vm44, %v68, 0.0
    %79 = vadd.xlane.f32.xlu0 %v78
    %v80 = vpop.xlane.xlu0 %79
    %v81 = vlog2.pop %v71
    %v82 = vmul.f32 %v81, 0.6931472
    %v83 = vlog2.pop %v74
    %v84 = vmul.f32 %v83, 0.6931472
    %v85 = vlog2.pop %v77
    %v86 = vmul.f32 %v85, 0.6931472
    %v87 = vlog2.pop %v80
    %v88 = vmul.f32 %v87, 0.6931472
    %v89 = vsel %vm40, %v57, 0.0
    %v90 = vsel %vm41, %v58, 0.0
    %v91 = vsel %vm42, %v59, 0.0
    %v92 = vsel %vm43, %v60, 0.0
    %v93 = vsel %vm44, %v89, 0.0
    %94 = vadd.xlane.f32.xlu0 %v93
    %v95 = vpop.xlane.xlu0 %94
    %v96 = vsel %vm44, %v90, 0.0
    %97 = vadd.xlane.f32.xlu0 %v96
    %v98 = vpop.xlane.xlu0 %97
    %v99 = vsel %vm44, %v91, 0.0
    %100 = vadd.xlane.f32.xlu0 %v99
    %v101 = vpop.xlane.xlu0 %100
    %v102 = vsel %vm44, %v92, 0.0
    %103 = vadd.xlane.f32.xlu0 %v102
    %v104 = vpop.xlane.xlu0 %103
    %v105 = vsub.f32 %v95, %v82
    %v106 = vsub.f32 %v98, %v84
    %v107 = vsub.f32 %v101, %v86
    %v108 = vsub.f32 %v104, %v88
    %v109 = vmul.f32 %v105, 1.442695
    %v110 = vpow.pop %v109
    %v111 = vmul.f32 %v106, 1.442695
    %v112 = vpow.pop %v111
    %v113 = vmul.f32 %v107, 1.442695
    %v114 = vpow.pop %v113
    %v115 = vmul.f32 %v108, 1.442695
    %v116 = vpow.pop %v115
    %v117 = vsub.f32 1.0, %v110
    %v118 = vsub.f32 1.0, %v112
    %v119 = vsub.f32 1.0, %v114
    %v120 = vsub.f32 1.0, %v116
    %v121 = vmul.f32 %v117, %v117
    %v122 = vmul.f32 %v118, %v118
    %v123 = vmul.f32 %v119, %v119
    %v124 = vmul.f32 %v120, %v120
    %v125 = vsub.f32 0.0, %v121
    %v126 = vsub.f32 0.0, %v122
    %v127 = vsub.f32 0.0, %v123
    %v128 = vsub.f32 0.0, %v124
    %v129 = vmul.f32 %v125, %v105
    %v130 = vmul.f32 %v126, %v106
    %v131 = vmul.f32 %v127, %v107
    %v132 = vmul.f32 %v128, %v108
    %s133 = smul.u32 0, 32
    %v134 = vlaneseq
    %v135 = vshrl.u32 %v134, 7
    %v136 = vadd.s32 %v135, 8
    %v137 = vadd.s32 %v135, 16
    %v138 = vadd.s32 %v135, 24
    %v139 = vstv %s133
    %v140 = vadd.s32 %v139, %v135
    %v141 = vadd.s32 %v139, %v136
    %v142 = vadd.s32 %v139, %v137
    %v143 = vadd.s32 %v139, %v138
    %vm144 = vcmp.lt.s32.totalorder %v140, 32
    %vm145 = vcmp.lt.s32.totalorder %v141, 32
    %vm146 = vcmp.lt.s32.totalorder %v142, 32
    %vm147 = vcmp.lt.s32.totalorder %v143, 32
    %v148 = vsel %vm144, %v129, 0.0
    %v149 = vsel %vm145, %v130, 0.0
    %v150 = vsel %vm146, %v131, 0.0
    %v151 = vsel %vm147, %v132, 0.0
    %v152 = vld [vmem:[#allocation2] sm:$0x1]
    %v153 = vadd.f32 %v148, %v149
    %v154 = vadd.f32 %v153, %v150
    %v155 = vadd.f32 %v154, %v151
    %v156 = vrot.slane %v155, 4
    %v157 = vadd.f32 %v155, %v156
    %v158 = vrot.slane %v157, 2
    %v159 = vadd.f32 %v157, %v158
    %v160 = vrot.slane %v159, 1
    %v161 = vadd.f32 %v159, %v160
    %v162 = vadd.f32 %v152, %v161
    %vm163 = vcmask 0
    %164 = vst.msk [vmem:[#allocation2] sm:$0x1] %vm163, %v162
    // Predicated region
    $region14: #{tpu_custom_call.1} parent=1 // pred_check
      %p165 = pneg %p12
    $region15: #{tpu_custom_call.1} parent=1 // pred_check_branch
      %167 = sbr.rel (%p165) target = $region17
    $region16: #{tpu_custom_call.1} parent=1 // pred_region
      %v168 = vld [vmem:[#allocation2] sm:$0x1]
      %v169 = vmul.f32 %v168, 0.03125
      %170 = vst.msk [vmem:[#allocation2] sm:$0x1] %vm163, %v169
    $region17: #{tpu_custom_call.1} parent=1 // pred_fallthru
      _
    // Predicated region
    $region18: #{tpu_custom_call.1} parent=1 // pred_check
      _
    $region19: #{tpu_custom_call.1} parent=1 // pred_check_branch
      %172 = sbr.rel (0) target = $region21
    $region20: #{tpu_custom_call.1} parent=1 // pred_region
      %s174 = ssub.s32 16, 16
      %175 = vsyncadd [#allocation3], %s174
      %s177 = sshll.u32 [#allocation2], 4
      %s178 = int_to_ptr.vmem [resolvable:$true] %s177
      %180 = dma.vmem_to_hbm [thread:$0]  %s178, 16, %s2, [#allocation3]
    $region21: #{tpu_custom_call.1} parent=1 // pred_fallthru
      _
    // Predicated region
    $region22: #{tpu_custom_call.1} parent=1 // pred_check
      _
    $region23: #{tpu_custom_call.1} parent=1 // pred_check_branch
      %182 = sbr.rel (0) target = $region25
    $region24: #{tpu_custom_call.1} parent=1 // pred_region
      %183 = dma.done [#allocation3], 16
    $region25: #{tpu_custom_call.1} parent=1 // pred_fallthru
      _
    %184 = vsyncpa [#allocation3], 1

</llo_original>
